<compile_context>
chip_gen: v6e
topology: v6e:2x2x1
jax: 0.10.0
libtpu: 0.0.40
codegen_flags: <defaults>
</compile_context>

<pallas_src>
import math
import numpy as np
import jax
import jax.numpy as jnp
from jax.experimental import pallas as pl
from jax.experimental.pallas import tpu as pltpu


# ----------------------------- host-side helpers (glue) -----------------------------

def _segments(seqlen, poolnum):
    per = np.cumsum(np.full((poolnum,), 1.0 / poolnum, dtype=np.float32) * seqlen)
    per = np.concatenate([np.zeros((1,), np.float32), per])
    fl = np.floor(per).astype(np.int64)
    ce = np.ceil(per).astype(np.int64)
    return fl[:-1], ce[1:]          # starts, ends  (torch: h[:, floor[j]:ceil[j+1], :])


def _chain_values(C):
    # TODO(synk): torch uses data-dependent `unique()`; JAX needs static shapes,
    # so chain discovery runs eagerly on the host (glue, not the hot path).
    vals = np.unique(np.abs(np.asarray(C)))
    return [float(v) for v in vals if v > 0]


# ----------------------------- Pallas kernel -----------------------------

def attn_pool_kernel(seg_len_ref, h_ref, w_ref, b_ref, out_ref):
    """One pool per grid step; every tensor is a lane-dense (.., k*128) tile."""
    j = pl.program_id(0)
    n_valid = seg_len_ref[j]                     # valid sequence length of this pool
    S = h_ref.shape[1]
    BE = h_ref.shape[2]

    hseg = h_ref[0]                              # (S, BE)      batch folded into lanes
    w_all = w_ref[0]                             # (BE, 3*BE)   [scoresW | V W | out W]
    b_all = b_ref[0]                             # (1, 3*BE)    [scores b | V b | out b]

    w_sv = w_all[:, : 2 * BE]                    # (BE, 2*BE)   fused score + V weights
    w_o = w_all[:, 2 * BE:]                      # (BE, BE)     blockdiag(Wo^T)
    b_sv = b_all[:, : 2 * BE]                    # (1, 2*BE)
    b_o = b_all[:, 2 * BE:]                      # (1, BE)

    # Single MXU matmul produces per-head scores (replicated across that head's
    # lanes) AND the V projection for all batches at once.
    sv = jnp.dot(hseg, w_sv, preferred_element_type=jnp.float32) + b_sv   # (S, 2*BE)
    scores = sv[:, :BE]                                                   # (S, BE)
    V = sv[:, BE:]                                                        # (S, BE)

    valid = jax.lax.broadcasted_iota(jnp.int32, (S, BE), 0) < n_valid
    scores = jnp.where(valid, scores, jnp.float32(-1e30))                 # f32-safe mask

    m = jnp.max(scores, axis=0, keepdims=True)                            # (1, BE)
    p = jnp.exp(scores - m)
    denom = jnp.sum(p, axis=0, keepdims=True)
    w = p * pl.reciprocal(denom, approx=True)                             # softmax over seq (EUP rcp)

    ctx = jnp.sum(w * V, axis=0, keepdims=True)                           # (1, BE)
    out_ref[0] = jnp.dot(ctx, w_o, preferred_element_type=jnp.float32) + b_o


# ----------------------------- wrapper -----------------------------

def attention_chain_pool(h, C, params, n_head, poolnum):
    """Pallas implementation of MyAttentionChainPool.forward."""
    bs, L, E = h.shape
    assert E % n_head == 0
    Dh = E // n_head
    BE = bs * E
    in_w, in_b, out_w, out_b = params             # (P,3E,E), (P,3E), (P,E,E), (P,E)

    chain_vals = _chain_values(C)
    NC = len(chain_vals)
    starts, ends = _segments(L, poolnum)
    lens = [int(e - s) for s, e in zip(starts, ends)]
    SEG = max(8, ((max(lens) + 7) // 8) * 8)      # pad seq tiles up to a sublane multiple

    # Gather + zero-pad per-pool segments, fold batch into lanes: (P, SEG, bs*E).
    segs = []
    for j in range(poolnum):
        seg = h[:, int(starts[j]):int(ends[j]), :]
        seg = jnp.pad(seg, ((0, 0), (0, SEG - seg.shape[1]), (0, 0)))
        segs.append(seg)
    h_segs = jnp.stack(segs, axis=0)                                   # (P, bs, SEG, E)
    h_fold = jnp.transpose(h_segs, (0, 2, 1, 3)).reshape(poolnum, SEG, BE)
    seg_len = jnp.asarray(lens, dtype=jnp.int32)                       # (P,)

    # Parameter prep (glue).
    Wq, Wk, Wv = in_w[:, :E, :], in_w[:, E:2 * E, :], in_w[:, 2 * E:, :]
    bq, bk, bv = in_b[:, :E], in_b[:, E:2 * E], in_b[:, 2 * E:]
    q = jnp.sum(Wq, axis=2) + bq                                       # ones-query projected, (P, E)

    head_idx = np.arange(E) // Dh
    head_eq = jnp.asarray(head_idx[:, None] == head_idx[None, :], jnp.float32)  # (E, E)
    scale = 1.0 / math.sqrt(Dh)
    qmat = q[:, :, None] * head_eq[None] * scale                       # (P, E, E) per-head query matrix

    # Fuse the K projection into the score matmul:
    #   scores = (h @ Wk^T + bk) @ qmat = h @ (Wk^T @ qmat) + (bk @ qmat)
    wkT = jnp.transpose(Wk, (0, 2, 1))
    Wsc = jnp.einsum('pki,pij->pkj', wkT, qmat)                        # (P, E, E)
    bsc = jnp.einsum('pi,pij->pj', bk, qmat)                           # (P, E)

    wvT = jnp.transpose(Wv, (0, 2, 1))
    woT = jnp.transpose(out_w, (0, 2, 1))

    eye_bs = jnp.eye(bs, dtype=jnp.float32)

    def bdiag(M):        # (P, E, E) -> (P, bs*E, bs*E), block-diagonal per batch
        return jnp.einsum('ab,pij->paibj', eye_bs, M).reshape(poolnum, BE, BE)

    # Collapse all operands into ONE weight slab and ONE bias slab per pool
    # (2 tensor DMAs per grid step instead of 3+).
    w_all = jnp.concatenate([bdiag(Wsc), bdiag(wvT), bdiag(woT)], axis=2)   # (P, BE, 3*BE)
    b_all = jnp.concatenate([jnp.tile(bsc, (1, bs)), jnp.tile(bv, (1, bs)),
                             jnp.tile(out_b, (1, bs))], axis=1)[:, None, :]  # (P, 1, 3*BE)
    # NOTE: on v6e/v7x h_fold / w_all could be cast to bf16 (f32 accumulation on
    # the dots) to halve DMA bytes; kept f32 here to preserve validation tolerance.

    grid_spec = pltpu.PrefetchScalarGridSpec(
        num_scalar_prefetch=1,
        grid=(poolnum,),
        in_specs=[
            pl.BlockSpec((1, SEG, BE), lambda j, sl: (j, 0, 0)),            # folded segments
            pl.BlockSpec((1, BE, 3 * BE), lambda j, sl: (j, 0, 0)),          # stacked weights
            pl.BlockSpec((1, 1, 3 * BE), lambda j, sl: (j, 0, 0)),           # stacked biases
        ],
        out_specs=pl.BlockSpec((1, 1, BE), lambda j, sl: (j, 0, 0)),
    )

    pool_flat = pl.pallas_call(
        attn_pool_kernel,
        out_shape=jax.ShapeDtypeStruct((poolnum, 1, BE), jnp.float32),
        grid_spec=grid_spec,
        compiler_params=pltpu.CompilerParams(dimension_semantics=("parallel",)),
    )(seg_len, h_fold, w_all, b_all)                                   # (P, 1, bs*E)

    pool_out = pool_flat.reshape(poolnum, bs, E)                       # (P, bs, E)

    # torch ordering after cat/split: output[b, k] with pool = k // NC; the
    # attention output is chain-independent (no mask is passed to MHA) -> replicate.
    output = jnp.repeat(jnp.transpose(pool_out, (1, 0, 2)), NC, axis=1)  # (bs, P*NC, E)

    # Chain mask: tiny (bs, L) reduction -- plain jnp (a dedicated pallas_call
    # costs more in launch + DMA overhead than the work itself).
    chain_mask = jnp.stack([jnp.any(C == jnp.float32(v), axis=-1) for v in chain_vals],
                           axis=-1)                                      # (bs, NC)
    return output, chain_mask


# ----------------------------- pure-JAX reference (for validation) -----------------------------

def reference_forward(h, C, params, n_head, poolnum):
    bs, L, E = h.shape
    Dh = E // n_head
    in_w, in_b, out_w, out_b = params
    chain_vals = _chain_values(C)
    NC = len(chain_vals)
    starts, ends = _segments(L, poolnum)
    pools = []
    for j in range(poolnum):
        hseg = h[:, int(starts[j]):int(ends[j]), :]
        Sj = hseg.shape[1]
        Wq, Wk, Wv = in_w[j, :E], in_w[j, E:2 * E], in_w[j, 2 * E:]
        bq, bk, bv = in_b[j, :E], in_b[j, E:2 * E], in_b[j, 2 * E:]
        q = jnp.ones((bs, 1, E), h.dtype) @ Wq.T + bq
        K = hseg @ Wk.T + bk
        V = hseg @ Wv.T + bv
        qh = q.reshape(bs, 1, n_head, Dh).transpose(0, 2, 1, 3)
        Kh = K.reshape(bs, Sj, n_head, Dh).transpose(0, 2, 1, 3)
        Vh = V.reshape(bs, Sj, n_head, Dh).transpose(0, 2, 1, 3)
        att = jax.nn.softmax(qh @ jnp.swapaxes(Kh, -1, -2) / math.sqrt(Dh), axis=-1)
        ctx = (att @ Vh).transpose(0, 2, 1, 3).reshape(bs, 1, E)
        o = ctx @ out_w[j].T + out_b[j]
        pools.append(o[:, 0, :])
    pool_out = jnp.stack(pools, axis=1)                     # (bs, P, E)
    output = jnp.repeat(pool_out, NC, axis=1)               # (bs, P*NC, E)
    chain_mask = jnp.stack([jnp.any(C == v, axis=-1) for v in chain_vals], axis=-1)
    return output, chain_mask


# ----------------------------- main -----------------------------

if __name__ == "__main__":
    bs, L, E = 2, 19, 64
    n_head, poolnum = 2, 4

    key = jax.random.PRNGKey(0)
    k_h, k_iw, k_ib, k_ow, k_ob = jax.random.split(key, 5)
    h = jax.random.normal(k_h, (bs, L, E), jnp.float32)
    # chain labels: batch 0 has chains {1, 2}; batch 1 has chain {1} plus padding zeros
    C = jnp.array([[1.0] * 9 + [2.0] * 10,
                   [1.0] * 16 + [0.0] * 3], dtype=jnp.float32)

    params = (
        0.1 * jax.random.normal(k_iw, (poolnum, 3 * E, E), jnp.float32),   # in_proj_weight
        0.1 * jax.random.normal(k_ib, (poolnum, 3 * E), jnp.float32),      # in_proj_bias
        0.1 * jax.random.normal(k_ow, (poolnum, E, E), jnp.float32),       # out_proj.weight
        0.1 * jax.random.normal(k_ob, (poolnum, E), jnp.float32),          # out_proj.bias
    )

    out, chain_mask = attention_chain_pool(h, C, params, n_head, poolnum)
    out = jax.block_until_ready(out)
    chain_mask = jax.block_until_ready(chain_mask)

    ref_out, ref_mask = reference_forward(h, C, params, n_head, poolnum)
    np.testing.assert_allclose(np.asarray(out), np.asarray(ref_out), rtol=2e-3, atol=2e-3)
    assert np.array_equal(np.asarray(chain_mask), np.asarray(ref_mask))
    assert out.shape == (bs, poolnum * 2, E)
    assert chain_mask.shape == (bs, 2)

    print("KERNEL_OK")
</pallas_src>

<mosaic_0001>
module attributes {stable_mosaic.version = 11 : i64} {
  func.func @attn_pool_kernel(%arg0: i32, %arg1: memref<4xi32, #tpu.memory_space<smem>>, %arg2: memref<1x8x128xf32, #tpu.memory_space<vmem>>, %arg3: memref<1x128x384xf32, #tpu.memory_space<vmem>>, %arg4: memref<1x1x384xf32, #tpu.memory_space<vmem>>, %arg5: memref<1x1x128xf32, #tpu.memory_space<vmem>>) attributes {dimension_semantics = [#tpu.dimension_semantics<parallel>], iteration_bounds = array<i64: 4>, scalar_prefetch = 1 : i64, scratch_operands = 0 : i64, tpu.core_type = #tpu.core_type<tc>, window_params = [{transform_indices = @transform_0, window_bounds = array<i64: 1, 8, 128>}, {transform_indices = @transform_1, window_bounds = array<i64: 1, 128, 384>}, {transform_indices = @transform_2, window_bounds = array<i64: 1, 1, 384>}, {transform_indices = @transform_3, window_bounds = array<i64: 1, 1, 128>}]} {
    %0 = arith.index_cast %arg0 : i32 to index
    %1 = memref.load %arg1[%0] : memref<4xi32, #tpu.memory_space<smem>>
    %c0 = arith.constant 0 : index
    %c0_0 = arith.constant 0 : index
    %c0_1 = arith.constant 0 : index
    %2 = vector.load %arg2[%c0, %c0_0, %c0_1] : memref<1x8x128xf32, #tpu.memory_space<vmem>>, vector<1x8x128xf32>
    %3 = vector.shape_cast %2 : vector<1x8x128xf32> to vector<8x128xf32>
    %c0_2 = arith.constant 0 : index
    %c0_3 = arith.constant 0 : index
    %c0_4 = arith.constant 0 : index
    %4 = vector.load %arg3[%c0_2, %c0_3, %c0_4] : memref<1x128x384xf32, #tpu.memory_space<vmem>>, vector<1x128x384xf32>
    %5 = vector.shape_cast %4 : vector<1x128x384xf32> to vector<128x384xf32>
    %c0_5 = arith.constant 0 : index
    %c0_6 = arith.constant 0 : index
    %c0_7 = arith.constant 0 : index
    %6 = vector.load %arg4[%c0_5, %c0_6, %c0_7] : memref<1x1x384xf32, #tpu.memory_space<vmem>>, vector<1x1x384xf32>
    %7 = vector.shape_cast %6 : vector<1x1x384xf32> to vector<1x384xf32>
    %8 = vector.extract_strided_slice %5 {offsets = [0, 0], sizes = [128, 256], strides = [1, 1]} : vector<128x384xf32> to vector<128x256xf32>
    %9 = vector.extract_strided_slice %5 {offsets = [0, 256], sizes = [128, 128], strides = [1, 1]} : vector<128x384xf32> to vector<128x128xf32>
    %10 = vector.extract_strided_slice %7 {offsets = [0, 0], sizes = [1, 256], strides = [1, 1]} : vector<1x384xf32> to vector<1x256xf32>
    %11 = vector.extract_strided_slice %7 {offsets = [0, 256], sizes = [1, 128], strides = [1, 1]} : vector<1x384xf32> to vector<1x128xf32>
    %cst = arith.constant dense<0.000000e+00> : vector<8x256xf32>
    %12 = tpu.matmul %3, %8, %cst {dimension_numbers = #tpu.dot_dimension_numbers<[1], [0], [0], [1], [0, 0, 1, 1], [], []>} : vector<8x128xf32>, vector<128x256xf32>, vector<8x256xf32> -> vector<8x256xf32>
    %13 = vector.broadcast %10 : vector<1x256xf32> to vector<8x256xf32>
    %14 = arith.addf %12, %13 : vector<8x256xf32>
    %15 = vector.extract_strided_slice %14 {offsets = [0, 0], sizes = [8, 128], strides = [1, 1]} : vector<8x256xf32> to vector<8x128xf32>
    %16 = vector.extract_strided_slice %14 {offsets = [0, 128], sizes = [8, 128], strides = [1, 1]} : vector<8x256xf32> to vector<8x128xf32>
    %17 = tpu.iota {dimensions = array<i32: 0>} : vector<8x128xi32>
    %18 = vector.broadcast %1 : i32 to vector<8x128xi32>
    %19 = arith.cmpi slt, %17, %18 : vector<8x128xi32>
    %cst_8 = arith.constant -1.000000e+30 : f32
    %20 = vector.broadcast %cst_8 : f32 to vector<8x128xf32>
    %21 = arith.select %19, %15, %20 : vector<8x128xi1>, vector<8x128xf32>
    %cst_9 = arith.constant dense<0xFF800000> : vector<128xf32>
    %22 = vector.multi_reduction <maximumf>, %21, %cst_9 [0] : vector<8x128xf32> to vector<128xf32>
    %23 = vector.shape_cast %22 : vector<128xf32> to vector<1x128xf32>
    %24 = vector.broadcast %23 : vector<1x128xf32> to vector<8x128xf32>
    %25 = arith.subf %21, %24 : vector<8x128xf32>
    %26 = math.exp %25 : vector<8x128xf32>
    %cst_10 = arith.constant dense<0.000000e+00> : vector<128xf32>
    %27 = vector.multi_reduction <add>, %26, %cst_10 [0] : vector<8x128xf32> to vector<128xf32>
    %28 = vector.shape_cast %27 : vector<128xf32> to vector<1x128xf32>
    %29 = tpu.reciprocal %28 {approx = true} : vector<1x128xf32> -> vector<1x128xf32>
    %30 = vector.broadcast %29 : vector<1x128xf32> to vector<8x128xf32>
    %31 = arith.mulf %26, %30 : vector<8x128xf32>
    %32 = arith.mulf %31, %16 : vector<8x128xf32>
    %cst_11 = arith.constant dense<0.000000e+00> : vector<128xf32>
    %33 = vector.multi_reduction <add>, %32, %cst_11 [0] : vector<8x128xf32> to vector<128xf32>
    %34 = vector.shape_cast %33 : vector<128xf32> to vector<1x128xf32>
    %cst_12 = arith.constant dense<0.000000e+00> : vector<1x128xf32>
    %35 = tpu.matmul %34, %9, %cst_12 {dimension_numbers = #tpu.dot_dimension_numbers<[1], [0], [0], [1], [0, 0, 1, 1], [], []>} : vector<1x128xf32>, vector<128x128xf32>, vector<1x128xf32> -> vector<1x128xf32>
    %36 = arith.addf %35, %11 : vector<1x128xf32>
    %c0_13 = arith.constant 0 : index
    %c0_14 = arith.constant 0 : index
    %c0_15 = arith.constant 0 : index
    %37 = vector.load %arg5[%c0_13, %c0_14, %c0_15] : memref<1x1x128xf32, #tpu.memory_space<vmem>>, vector<1x1x128xf32>
    %38 = vector.shape_cast %37 : vector<1x1x128xf32> to vector<1x128xf32>
    %39 = vector.shape_cast %36 : vector<1x128xf32> to vector<1x1x128xf32>
    tpu.vector_store %arg5[%c0_13, %c0_14, %c0_15], %39 {strides = array<i32>} : memref<1x1x128xf32, #tpu.memory_space<vmem>>, vector<1x1x128xf32>,
    return
  }
  func.func @transform_0(%arg0: i32, %arg1: memref<4xi32, #tpu.memory_space<smem>>) -> (i32, i32, i32) {
    %c0_i32 = arith.constant 0 : i32
    %c0_i32_0 = arith.constant 0 : i32
    %c0_i32_1 = arith.constant 0 : i32
    return %arg0, %c0_i32, %c0_i32_0 : i32, i32, i32
  }
  func.func @transform_1(%arg0: i32, %arg1: memref<4xi32, #tpu.memory_space<smem>>) -> (i32, i32, i32) {
    %c0_i32 = arith.constant 0 : i32
    %c0_i32_0 = arith.constant 0 : i32
    %c0_i32_1 = arith.constant 0 : i32
    return %arg0, %c0_i32, %c0_i32_0 : i32, i32, i32
  }
  func.func @transform_2(%arg0: i32, %arg1: memref<4xi32, #tpu.memory_space<smem>>) -> (i32, i32, i32) {
    %c0_i32 = arith.constant 0 : i32
    %c0_i32_0 = arith.constant 0 : i32
    %c0_i32_1 = arith.constant 0 : i32
    return %arg0, %c0_i32, %c0_i32_0 : i32, i32, i32
  }
  func.func @transform_3(%arg0: i32, %arg1: memref<4xi32, #tpu.memory_space<smem>>) -> (i32, i32, i32) {
    %c0_i32 = arith.constant 0 : i32
    %c0_i32_0 = arith.constant 0 : i32
    %c0_i32_1 = arith.constant 0 : i32
    return %arg0, %c0_i32, %c0_i32_0 : i32, i32, i32
  }
}

</mosaic_0001>

<llo_original>
// kernel: tpu_custom_call.1
$region0: #{tpu_custom_call.1}
  #allocation0 [shape = 'u32[]', space=smem, size = 0x4, offset = 0x4, fixed_abs, tag = 'smem constant byte address 0x4 - core index']
  #allocation1 [shape = 'u32[144,128]{1,0:T(1,128)}', space=vmem, size = 0x12000, scoped, tag = 'internal scratch']
  #allocation2 [shape = 's32[1]{0}', space=sflag, size = 0x4, scoped, tag = 'scoped memory for tpu_custom_call.1']
  #allocation3 [shape = 'u8[512]{0}', space=smem, size = 0x200, scoped, tag = 'prefetched SMEM operand 0']
  %s0 = inlined_call_operand.hbm [shape: s32[4], index: 0, kind: input, shape index: {}]
  %s1 = inlined_call_operand.hbm [shape: f32[4,8,128], index: 1, kind: input, shape index: {}]
  %s2 = inlined_call_operand.hbm [shape: f32[4,128,384], index: 2, kind: input, shape index: {}]
  %s3 = inlined_call_operand.hbm [shape: f32[4,1,384], index: 3, kind: input, shape index: {}]
  %s4 = inlined_call_operand.hbm [shape: f32[4,1,128], index: 4, kind: output, shape index: {}]
  %s5 = sld [smem:[#allocation0]]
  $region57: #{tpu_custom_call.1} parent=0
    _
  %s7 = ssub.s32 1, %s5
  %s8 = scalar_select 0, %s7, %s5
  %10 = dma.hbm_to_smem %s0, 16, [#allocation3], [#allocation2]
  %11 = dma.done [#allocation2], 16
  %12 = sfence
  $region1: #{tpu_custom_call.1} parent=0
    #allocation4 [shape = 'u8[8192]{0}', space=vmem, size = 0x2000, scoped, tag = 'input window, operand 1']
    #allocation5 [shape = 's32[2]{0}', space=sflag, size = 0x8, scoped, tag = 'scoped memory for tpu_custom_call.1']
    #allocation6 [shape = 's32[2]{0}', space=sflag, size = 0x8, scoped, tag = 'scoped memory for tpu_custom_call.1']
    #allocation7 [shape = 'u8[393216]{0}', space=vmem, size = 0x60000, scoped, tag = 'input window, operand 2']
    #allocation8 [shape = 's32[2]{0}', space=sflag, size = 0x8, scoped, tag = 'scoped memory for tpu_custom_call.1']
    #allocation9 [shape = 'u8[3072]{0}', space=vmem, size = 0xc00, scoped, tag = 'input window, operand 3']
    #allocation10 [shape = 'u8[1024]{0}', space=vmem, size = 0x400, scoped, tag = 'output window, operand 0']
    %13 = vsyncpa [#allocation5], 0
    %s14 = scalar_lea.sflag [#allocation5], 1
    %15 = vsyncpa %s14, 0
    %16 = vsyncpa [#allocation8], 0
    %s17 = scalar_lea.sflag [#allocation8], 1
    %18 = vsyncpa %s17, 0
    %19 = vsyncpa [#allocation6], 0
    %s20 = scalar_lea.sflag [#allocation6], 1
    %21 = vsyncpa %s20, 0
    loop: start=0, step=1, limit=6
    $region2: #{tpu_custom_call.1} parent=1 // loop_pre_header
      _
    $region3: #{tpu_custom_call.1} parent=1 // loop_header
      %s23 = sphi 0, %s27
      %p24 = scmp.ge.s32.totalorder %s23, 6
      %s33 = sphi 0, %s35
      %s36 = sphi 0, %s33
      %s37 = sphi 0, %s36
      %s53 = sphi 0, %s37
      %s59 = sphi 0, %s61
      %s62 = sphi 0, %s59
      %s63 = sphi 0, %s62
      %s79 = sphi 0, %s63
      %s85 = sphi 0, %s87
      %s88 = sphi 0, %s85
      %s89 = sphi 0, %s88
      %s105 = sphi 0, %s89
      %s111 = sphi 0, %s113
      %s114 = sphi 0, %s111
      %s115 = sphi 0, %s114
      %s131 = sphi 0, %s115
    $region4: #{tpu_custom_call.1} parent=1 // loop_header_branch
      %26 = sbr.rel (%p24) target = $region8
    $region5: #{tpu_custom_call.1} parent=1 // loop_body
      %s28 = ssub.s32 %s23, 1
      %s29 = ssub.s32 %s23, 2
      %s30 = sadd.s32 %s23, 1
      %s31 = ssub.s32 %s23, %s30
      %p32 = scmp.eq.s32.totalorder %s31, 0
      %s34 = sadd.s32 %s33, 1
      %s35 = scalar_select %p32, %s33, %s34
      %p38 = pneg %p32
      %p39 = scmp.eq.s32.totalorder %s23, 3
      %p40 = por %p38, %p39
      %p41 = scmp.ne.s32.totalorder %s33, %s36
      %p42 = scmp.eq.s32.totalorder %s23, 0
      %p43 = por %p41, %p42
      %p44 = scmp.ne.s32.totalorder %s33, %s36
      %p45 = scmp.eq.s32.totalorder %s28, 3
      %p46 = por %p44, %p45
      %p47 = scmp.ne.s32.totalorder %s36, %s37
      %p48 = scmp.eq.s32.totalorder %s28, 0
      %p49 = por %p47, %p48
      %p50 = scmp.ne.s32.totalorder %s36, %s37
      %p51 = scmp.eq.s32.totalorder %s29, 3
      %p52 = por %p50, %p51
      %p54 = scmp.ne.s32.totalorder %s37, %s53
      %p55 = scmp.eq.s32.totalorder %s29, 0
      %p56 = por %p54, %p55
      %s57 = ssub.s32 %s23, %s30
      %p58 = scmp.eq.s32.totalorder %s57, 0
      %s60 = sadd.s32 %s59, 1
      %s61 = scalar_select %p58, %s59, %s60
      %p64 = pneg %p58
      %p65 = scmp.eq.s32.totalorder %s23, 3
      %p66 = por %p64, %p65
      %p67 = scmp.ne.s32.totalorder %s59, %s62
      %p68 = scmp.eq.s32.totalorder %s23, 0
      %p69 = por %p67, %p68
      %p70 = scmp.ne.s32.totalorder %s59, %s62
      %p71 = scmp.eq.s32.totalorder %s28, 3
      %p72 = por %p70, %p71
      %p73 = scmp.ne.s32.totalorder %s62, %s63
      %p74 = scmp.eq.s32.totalorder %s28, 0
      %p75 = por %p73, %p74
      %p76 = scmp.ne.s32.totalorder %s62, %s63
      %p77 = scmp.eq.s32.totalorder %s29, 3
      %p78 = por %p76, %p77
      %p80 = scmp.ne.s32.totalorder %s63, %s79
      %p81 = scmp.eq.s32.totalorder %s29, 0
      %p82 = por %p80, %p81
      %s83 = ssub.s32 %s23, %s30
      %p84 = scmp.eq.s32.totalorder %s83, 0
      %s86 = sadd.s32 %s85, 1
      %s87 = scalar_select %p84, %s85, %s86
      %p90 = pneg %p84
      %p91 = scmp.eq.s32.totalorder %s23, 3
      %p92 = por %p90, %p91
      %p93 = scmp.ne.s32.totalorder %s85, %s88
      %p94 = scmp.eq.s32.totalorder %s23, 0
      %p95 = por %p93, %p94
      %p96 = scmp.ne.s32.totalorder %s85, %s88
      %p97 = scmp.eq.s32.totalorder %s28, 3
      %p98 = por %p96, %p97
      %p99 = scmp.ne.s32.totalorder %s88, %s89
      %p100 = scmp.eq.s32.totalorder %s28, 0
      %p101 = por %p99, %p100
      %p102 = scmp.ne.s32.totalorder %s88, %s89
      %p103 = scmp.eq.s32.totalorder %s29, 3
      %p104 = por %p102, %p103
      %p106 = scmp.ne.s32.totalorder %s89, %s105
      %p107 = scmp.eq.s32.totalorder %s29, 0
      %p108 = por %p106, %p107
      %s109 = ssub.s32 %s23, %s30
      %p110 = scmp.eq.s32.totalorder %s109, 0
      %s112 = sadd.s32 %s111, 1
      %s113 = scalar_select %p110, %s111, %s112
      %p116 = pneg %p110
      %p117 = scmp.eq.s32.totalorder %s23, 3
      %p118 = por %p116, %p117
      %p119 = scmp.ne.s32.totalorder %s111, %s114
      %p120 = scmp.eq.s32.totalorder %s23, 0
      %p121 = por %p119, %p120
      %p122 = scmp.ne.s32.totalorder %s111, %s114
      %p123 = scmp.eq.s32.totalorder %s28, 3
      %p124 = por %p122, %p123
      %p125 = scmp.ne.s32.totalorder %s114, %s115
      %p126 = scmp.eq.s32.totalorder %s28, 0
      %p127 = por %p125, %p126
      %p128 = scmp.ne.s32.totalorder %s114, %s115
      %p129 = scmp.eq.s32.totalorder %s29, 3
      %p130 = por %p128, %p129
      %p132 = scmp.ne.s32.totalorder %s115, %s131
      %p133 = scmp.eq.s32.totalorder %s29, 0
      %p134 = por %p132, %p133
      %p135 = scmp.le.s32.totalorder 1, %s23
      %p136 = scmp.lt.s32.totalorder %s23, 5
      %p137 = pnand %p135, %p136
      %p138 = pneg %p137
      // Predicated region
      $region9: #{tpu_custom_call.1} parent=5 // pred_check
        _
      $region10: #{tpu_custom_call.1} parent=5 // pred_check_branch
        %140 = sbr.rel (%p137) target = $region12
      $region11: #{tpu_custom_call.1} parent=5 // pred_region
        %s141 = ssub.s32 %s23, 1
      $region12: #{tpu_custom_call.1} parent=5 // pred_fallthru
        _
      %p142 = scmp.lt.s32.totalorder %s23, 4
      // Predicated region
      $region13: #{tpu_custom_call.1} parent=5 // pred_check
        %p143 = pneg %p142
      $region14: #{tpu_custom_call.1} parent=5 // pred_check_branch
        %145 = sbr.rel (%p143) target = $region16
      $region15: #{tpu_custom_call.1} parent=5 // pred_region
        // Predicated region
        $region17: #{tpu_custom_call.1} parent=15 // pred_check
          %p146 = pneg %p43
        $region18: #{tpu_custom_call.1} parent=15 // pred_check_branch
          %148 = sbr.rel (%p146) target = $region20
        $region19: #{tpu_custom_call.1} parent=15 // pred_region
          %s149 = sand.u32 %s33, 1
          %s150 = scalar_lea.sflag [#allocation5], %s149
          %s151 = sand.u32 %s33, 1
          %s152 = smul.addr %s151, 8
          %s153 = scalar_lea.vmem [#allocation4], %s152
          %s155 = ssub.s32 128, 128
          %156 = vsyncadd %s150, %s155
          %s157 = smul.addr %s23, 128
          %s158 = scalar_lea.hbm %s1, %s157
          %s160 = sshll.u32 %s153, 4
          %s161 = int_to_ptr.vmem [resolvable:$true] %s160
          %163 = dma.hbm_to_vmem [thread:$0]  %s158, 128, %s161, %s150
        $region20: #{tpu_custom_call.1} parent=15 // pred_fallthru
          _
        // Predicated region
        $region21: #{tpu_custom_call.1} parent=15 // pred_check
          %p164 = pneg %p69
        $region22: #{tpu_custom_call.1} parent=15 // pred_check_branch
          %166 = sbr.rel (%p164) target = $region24
        $region23: #{tpu_custom_call.1} parent=15 // pred_region
          %s167 = sand.u32 %s23, 1
          %s168 = scalar_lea.sflag [#allocation8], %s167
          %s169 = sand.u32 %s59, 1
          %s170 = smul.addr %s169, 384
          %s171 = scalar_lea.vmem [#allocation7], %s170
          %s173 = ssub.s32 6144, 6144
          %174 = vsyncadd %s168, %s173
          %s175 = smul.addr %s23, 48
          %s176 = smul.addr %s175, 128
          %s177 = scalar_lea.hbm %s2, %s176
          %s178 = sshll.u32 %s171, 4
          %s179 = int_to_ptr.vmem [resolvable:$true] %s178
          %184 = dma.hbm_to_vmem [thread:$0]  %s177, 6144, %s179, %s168, 384, 384, 24
        $region24: #{tpu_custom_call.1} parent=15 // pred_fallthru
          _
        // Predicated region
        $region25: #{tpu_custom_call.1} parent=15 // pred_check
          %p185 = pneg %p95
        $region26: #{tpu_custom_call.1} parent=15 // pred_check_branch
          %187 = sbr.rel (%p185) target = $region28
        $region27: #{tpu_custom_call.1} parent=15 // pred_region
          %s188 = sand.u32 %s23, 1
          %s189 = scalar_lea.sflag [#allocation8], %s188
          %s190 = sand.u32 %s85, 1
          %s191 = smul.addr %s190, 3
          %s192 = scalar_lea.vmem [#allocation9], %s191
          %s194 = ssub.s32 48, 48
          %195 = vsyncadd %s189, %s194
          %s196 = smul.addr %s23, 3
          %s197 = smul.addr %s196, 16
          %s198 = scalar_lea.hbm %s3, %s197
          %s200 = sshll.u32 %s192, 4
          %s201 = int_to_ptr.vmem [resolvable:$true] %s200
          %203 = dma.hbm_to_vmem [thread:$0]  %s198, 48, %s201, %s189
        $region28: #{tpu_custom_call.1} parent=15 // pred_fallthru
          _
      $region16: #{tpu_custom_call.1} parent=5 // pred_fallthru
        _
      %p204 = scmp.le.s32.totalorder 1, %s23
      %p205 = scmp.lt.s32.totalorder %s23, 5
      %p206 = pnand %p204, %p205
      %p207 = pneg %p206
      // Predicated region
      $region29: #{tpu_custom_call.1} parent=5 // pred_check
        _
      $region30: #{tpu_custom_call.1} parent=5 // pred_check_branch
        %209 = sbr.rel (%p206) target = $region32
      $region31: #{tpu_custom_call.1} parent=5 // pred_region
        %s210 = ssub.s32 %s23, 1
        %s211 = sand.u32 %s36, 1
        %s212 = scalar_lea.sflag [#allocation5], %s211
        %s213 = sand.u32 %s36, 1
        %s214 = smul.addr %s213, 8
        %s215 = scalar_lea.vmem [#allocation4], %s214
        // Predicated region
        $region33: #{tpu_custom_call.1} parent=31 // pred_check
          %p216 = pneg %p49
        $region34: #{tpu_custom_call.1} parent=31 // pred_check_branch
          %218 = sbr.rel (%p216) target = $region36
        $region35: #{tpu_custom_call.1} parent=31 // pred_region
          %219 = dma.done %s212, 128
        $region36: #{tpu_custom_call.1} parent=31 // pred_fallthru
          _
        %s220 = sand.u32 %s28, 1
        %s221 = scalar_lea.sflag [#allocation8], %s220
        %s222 = sand.u32 %s62, 1
        %s223 = smul.addr %s222, 384
        %s224 = scalar_lea.vmem [#allocation7], %s223
        // Predicated region
        $region37: #{tpu_custom_call.1} parent=31 // pred_check
          %p225 = pneg %p75
        $region38: #{tpu_custom_call.1} parent=31 // pred_check_branch
          %227 = sbr.rel (%p225) target = $region40
        $region39: #{tpu_custom_call.1} parent=31 // pred_region
          %228 = dma.done %s221, 6144
        $region40: #{tpu_custom_call.1} parent=31 // pred_fallthru
          _
        %s229 = sand.u32 %s28, 1
        %s230 = scalar_lea.sflag [#allocation8], %s229
        %s231 = sand.u32 %s88, 1
        %s232 = smul.addr %s231, 3
        %s233 = scalar_lea.vmem [#allocation9], %s232
        // Predicated region
        $region41: #{tpu_custom_call.1} parent=31 // pred_check
          %p234 = pneg %p101
        $region42: #{tpu_custom_call.1} parent=31 // pred_check_branch
          %236 = sbr.rel (%p234) target = $region44
        $region43: #{tpu_custom_call.1} parent=31 // pred_region
          %237 = dma.done %s230, 48
        $region44: #{tpu_custom_call.1} parent=31 // pred_fallthru
          _
        %s238 = sand.u32 %s36, 1
        %s239 = scalar_lea.sflag [#allocation5], %s238
        %s240 = sand.u32 %s36, 1
        %s241 = smul.addr %s240, 8
        %s242 = scalar_lea.vmem [#allocation4], %s241
        %p243 = pneg %p49
        %p244 = pneg %p46
        %s245 = sand.u32 %s28, 1
        %s246 = scalar_lea.sflag [#allocation8], %s245
        %s247 = sand.u32 %s62, 1
        %s248 = smul.addr %s247, 384
        %s249 = scalar_lea.vmem [#allocation7], %s248
        %p250 = pneg %p75
        %p251 = pneg %p72
        %s252 = sand.u32 %s28, 1
        %s253 = scalar_lea.sflag [#allocation8], %s252
        %s254 = sand.u32 %s88, 1
        %s255 = smul.addr %s254, 3
        %s256 = scalar_lea.vmem [#allocation9], %s255
        %p257 = pneg %p101
        %p258 = pneg %p98
        %p259 = pneg %p127
        %p260 = pneg %p124
        %s261 = sand.u32 %s114, 1
        %s262 = scalar_lea.sflag [#allocation6], %s261
        %s263 = sand.u32 %s114, 1
        %s264 = scalar_lea.vmem [#allocation10], %s263
        %s265 = sld [smem:[#allocation3 + %s28]]
        %v266 = vld [vmem:[%s215] sm:$0xff]
        %v267 = vld [vmem:[%s224] sm:$0xff]
        %v268 = vld [vmem:[%s224 + $0x8] sm:$0xff]
        %v269 = vld [vmem:[%s224 + $0x10] sm:$0xff]
        %v270 = vld [vmem:[%s224 + $0x18] sm:$0xff]
        %v271 = vld [vmem:[%s224 + $0x20] sm:$0xff]
        %v272 = vld [vmem:[%s224 + $0x28] sm:$0xff]
        %v273 = vld [vmem:[%s224 + $0x30] sm:$0xff]
        %v274 = vld [vmem:[%s224 + $0x38] sm:$0xff]
        %v275 = vld [vmem:[%s224 + $0x40] sm:$0xff]
        %v276 = vld [vmem:[%s224 + $0x48] sm:$0xff]
        %v277 = vld [vmem:[%s224 + $0x50] sm:$0xff]
        %v278 = vld [vmem:[%s224 + $0x58] sm:$0xff]
        %v279 = vld [vmem:[%s224 + $0x60] sm:$0xff]
        %v280 = vld [vmem:[%s224 + $0x68] sm:$0xff]
        %v281 = vld [vmem:[%s224 + $0x70] sm:$0xff]
        %v282 = vld [vmem:[%s224 + $0x78] sm:$0xff]
        %v283 = vld [vmem:[%s224 + $0x80] sm:$0xff]
        %v284 = vld [vmem:[%s224 + $0x88] sm:$0xff]
        %v285 = vld [vmem:[%s224 + $0x90] sm:$0xff]
        %v286 = vld [vmem:[%s224 + $0x98] sm:$0xff]
        %v287 = vld [vmem:[%s224 + $0xa0] sm:$0xff]
        %v288 = vld [vmem:[%s224 + $0xa8] sm:$0xff]
        %v289 = vld [vmem:[%s224 + $0xb0] sm:$0xff]
        %v290 = vld [vmem:[%s224 + $0xb8] sm:$0xff]
        %v291 = vld [vmem:[%s224 + $0xc0] sm:$0xff]
        %v292 = vld [vmem:[%s224 + $0xc8] sm:$0xff]
        %v293 = vld [vmem:[%s224 + $0xd0] sm:$0xff]
        %v294 = vld [vmem:[%s224 + $0xd8] sm:$0xff]
        %v295 = vld [vmem:[%s224 + $0xe0] sm:$0xff]
        %v296 = vld [vmem:[%s224 + $0xe8] sm:$0xff]
        %v297 = vld [vmem:[%s224 + $0xf0] sm:$0xff]
        %v298 = vld [vmem:[%s224 + $0xf8] sm:$0xff]
        %v299 = vld [vmem:[%s224 + $0x100] sm:$0xff]
        %v300 = vld [vmem:[%s224 + $0x108] sm:$0xff]
        %v301 = vld [vmem:[%s224 + $0x110] sm:$0xff]
        %v302 = vld [vmem:[%s224 + $0x118] sm:$0xff]
        %v303 = vld [vmem:[%s224 + $0x120] sm:$0xff]
        %v304 = vld [vmem:[%s224 + $0x128] sm:$0xff]
        %v305 = vld [vmem:[%s224 + $0x130] sm:$0xff]
        %v306 = vld [vmem:[%s224 + $0x138] sm:$0xff]
        %v307 = vld [vmem:[%s224 + $0x140] sm:$0xff]
        %v308 = vld [vmem:[%s224 + $0x148] sm:$0xff]
        %v309 = vld [vmem:[%s224 + $0x150] sm:$0xff]
        %v310 = vld [vmem:[%s224 + $0x158] sm:$0xff]
        %v311 = vld [vmem:[%s224 + $0x160] sm:$0xff]
        %v312 = vld [vmem:[%s224 + $0x168] sm:$0xff]
        %v313 = vld [vmem:[%s224 + $0x170] sm:$0xff]
        %v314 = vld [vmem:[%s224 + $0x178] sm:$0xff]
        %v315 = vld [vmem:[%s233] sm:$0x7]
        %v317 = vlaneseq
        %v318 = vshrl.u32 %v317, 7
        %v319 = vsub.s32 0, %v318
        %v320 = vrot.slane %v315, %v319
        %v321 = vlaneseq
        %v322 = vshrl.u32 %v321, 7
        %v323 = vsub.s32 1, %v322
        %v324 = vrot.slane %v315, %v323
        %327 = vmatprep.subr.mxu0 %v313
        %328 = vmatpush1.msra.mxu0 %v312
        %329 = vmatprep.subr.mxu0 %v310
        %330 = vmatpush1.msra.mxu0 %v309
        %331 = vmatprep.subr.mxu0 %v307
        %332 = vmatpush1.msra.mxu0 %v306
        %333 = vmatprep.subr.mxu0 %v304
        %334 = vmatpush1.msra.mxu0 %v303
        %335 = vmatprep.subr.mxu0 %v301
        %336 = vmatpush1.msra.mxu0 %v300
        %337 = vmatprep.subr.mxu0 %v298
        %338 = vmatpush1.msra.mxu0 %v297
        %339 = vmatprep.subr.mxu0 %v295
        %340 = vmatpush1.msra.mxu0 %v294
        %341 = vmatprep.subr.mxu0 %v292
        %342 = vmatpush1.msra.mxu0 %v291
        %343 = vmatprep.subr.mxu0 %v289
        %344 = vmatpush1.msra.mxu0 %v288
        %345 = vmatprep.subr.mxu0 %v286
        %346 = vmatpush1.msra.mxu0 %v285
        %347 = vmatprep.subr.mxu0 %v283
        %348 = vmatpush1.msra.mxu0 %v282
        %349 = vmatprep.subr.mxu0 %v280
        %350 = vmatpush1.msra.mxu0 %v279
        %351 = vmatprep.subr.mxu0 %v277
        %352 = vmatpush1.msra.mxu0 %v276
        %353 = vmatprep.subr.mxu0 %v274
        %354 = vmatpush1.msra.mxu0 %v273
        %355 = vmatprep.subr.mxu0 %v271
        %356 = vmatpush1.msra.mxu0 %v270
        %357 = vmatprep.subr.mxu0 %v268
        %358 = vmatpush1.msra.mxu0 %v267
        %359 = vmatprep.subr.mxu0 0.0
        %360 = vmatpush2.msra.mxu0 0.0
        %361 = vmatprep.subr.mxu0 0.0
        %362 = vmatpush2.msra.mxu0 0.0
        %363 = vmatprep.subr.mxu0 0.0
        %364 = vmatpush2.msra.mxu0 0.0
        %365 = vmatprep.subr.mxu0 0.0
        %366 = vmatpush2.msra.mxu0 0.0
        %367 = vmatprep.subr.mxu0 0.0
        %368 = vmatpush2.msra.mxu0 0.0
        %369 = vmatprep.subr.mxu0 0.0
        %370 = vmatpush2.msra.mxu0 0.0
        %371 = vmatprep.subr.mxu0 0.0
        %372 = vmatpush2.msra.mxu0 0.0
        %373 = vmatprep.subr.mxu0 0.0
        %374 = vmatpush2.msra.mxu0 0.0
        %375 = vmatprep.subr.mxu0 0.0
        %376 = vmatpush2.msra.mxu0 0.0
        %377 = vmatprep.subr.mxu0 0.0
        %378 = vmatpush2.msra.mxu0 0.0
        %379 = vmatprep.subr.mxu0 0.0
        %380 = vmatpush2.msra.mxu0 0.0
        %381 = vmatprep.subr.mxu0 0.0
        %382 = vmatpush2.msra.mxu0 0.0
        %383 = vmatprep.subr.mxu0 0.0
        %384 = vmatpush2.msra.mxu0 0.0
        %385 = vmatprep.subr.mxu0 0.0
        %386 = vmatpush2.msra.mxu0 0.0
        %387 = vmatprep.subr.mxu0 0.0
        %388 = vmatpush2.msra.mxu0 0.0
        %389 = vmatprep.subr.mxu0 0.0
        %390 = vmatpush2.msra.mxu0 0.0
        %391 = vmatprep.mubr.f32.mxu0 0.0
        %392 = vmatmul.mubr.f32.gmra.mxu0 %v266
        %v393 = vpop.f32.mrf.mxu0
        %v394 = vadd.f32 %v320, %v393
        %v395 = vpop.f32.mrf.mxu0
        %v396 = vadd.f32 %v324, %v395
        %397 = vdwg.mxu0
        %v398 = vlaneseq
        %v399 = vshrl.u32 %v398, 7
        %v400 = vstv %s265
        %vm401 = vcmp.lt.s32.totalorder %v399, %v400
        %v402 = vsel %vm401, %v394, -1e+30
        %v403 = vrot.slane %v402, 4
        %v404 = vmax.f32 %v402, %v403
        %v405 = vrot.slane %v404, 2
        %v406 = vmax.f32 %v404, %v405
        %v407 = vrot.slane %v406, 1
        %v408 = vmax.f32 %v406, %v407
        %v409 = vsub.f32 %v402, %v408
        %v410 = vmul.f32 %v409, 1.442695
        %v411 = vpow.pop %v410
        %v412 = vrot.slane %v411, 4
        %v413 = vadd.f32 %v411, %v412
        %v414 = vrot.slane %v413, 2
        %v415 = vadd.f32 %v413, %v414
        %v416 = vrot.slane %v415, 1
        %v417 = vadd.f32 %v415, %v416
        %v418 = vrcp.pop %v417
        %v419 = vmul.f32 %v411, %v418
        %v420 = vmul.f32 %v419, %v396
        %v421 = vrot.slane %v420, 4
        %v422 = vadd.f32 %v420, %v421
        %v423 = vrot.slane %v422, 2
        %v424 = vadd.f32 %v422, %v423
        %v425 = vrot.slane %v424, 1
        %v426 = vadd.f32 %v424, %v425
        %v427 = vlaneseq
        %v428 = vshrl.u32 %v427, 7
        %v429 = vsub.s32 2, %v428
        %v430 = vrot.slane %v315, %v429
        %432 = vmatprep.subr.mxu0 0.0
        %433 = vmatpush1.msra.mxu0 %v314
        %434 = vmatprep.subr.mxu0 0.0
        %435 = vmatpush1.msra.mxu0 %v311
        %436 = vmatprep.subr.mxu0 0.0
        %437 = vmatpush1.msra.mxu0 %v308
        %438 = vmatprep.subr.mxu0 0.0
        %439 = vmatpush1.msra.mxu0 %v305
        %440 = vmatprep.subr.mxu0 0.0
        %441 = vmatpush1.msra.mxu0 %v302
        %442 = vmatprep.subr.mxu0 0.0
        %443 = vmatpush1.msra.mxu0 %v299
        %444 = vmatprep.subr.mxu0 0.0
        %445 = vmatpush1.msra.mxu0 %v296
        %446 = vmatprep.subr.mxu0 0.0
        %447 = vmatpush1.msra.mxu0 %v293
        %448 = vmatprep.subr.mxu0 0.0
        %449 = vmatpush1.msra.mxu0 %v290
        %450 = vmatprep.subr.mxu0 0.0
        %451 = vmatpush1.msra.mxu0 %v287
        %452 = vmatprep.subr.mxu0 0.0
        %453 = vmatpush1.msra.mxu0 %v284
        %454 = vmatprep.subr.mxu0 0.0
        %455 = vmatpush1.msra.mxu0 %v281
        %456 = vmatprep.subr.mxu0 0.0
        %457 = vmatpush1.msra.mxu0 %v278
        %458 = vmatprep.subr.mxu0 0.0
        %459 = vmatpush1.msra.mxu0 %v275
        %460 = vmatprep.subr.mxu0 0.0
        %461 = vmatpush1.msra.mxu0 %v272
        %462 = vmatprep.subr.mxu0 0.0
        %463 = vmatpush1.msra.mxu0 %v269
        %464 = vmatprep.subr.mxu0 0.0
        %465 = vmatpush2.msra.mxu0 0.0
        %466 = vmatprep.subr.mxu0 0.0
        %467 = vmatpush2.msra.mxu0 0.0
        %468 = vmatprep.subr.mxu0 0.0
        %469 = vmatpush2.msra.mxu0 0.0
        %470 = vmatprep.subr.mxu0 0.0
        %471 = vmatpush2.msra.mxu0 0.0
        %472 = vmatprep.subr.mxu0 0.0
        %473 = vmatpush2.msra.mxu0 0.0
        %474 = vmatprep.subr.mxu0 0.0
        %475 = vmatpush2.msra.mxu0 0.0
        %476 = vmatprep.subr.mxu0 0.0
        %477 = vmatpush2.msra.mxu0 0.0
        %478 = vmatprep.subr.mxu0 0.0
        %479 = vmatpush2.msra.mxu0 0.0
        %480 = vmatprep.subr.mxu0 0.0
        %481 = vmatpush2.msra.mxu0 0.0
        %482 = vmatprep.subr.mxu0 0.0
        %483 = vmatpush2.msra.mxu0 0.0
        %484 = vmatprep.subr.mxu0 0.0
        %485 = vmatpush2.msra.mxu0 0.0
        %486 = vmatprep.subr.mxu0 0.0
        %487 = vmatpush2.msra.mxu0 0.0
        %488 = vmatprep.subr.mxu0 0.0
        %489 = vmatpush2.msra.mxu0 0.0
        %490 = vmatprep.subr.mxu0 0.0
        %491 = vmatpush2.msra.mxu0 0.0
        %492 = vmatprep.subr.mxu0 0.0
        %493 = vmatpush2.msra.mxu0 0.0
        %494 = vmatprep.subr.mxu0 0.0
        %495 = vmatpush2.msra.mxu0 0.0
        %496 = vmatprep.mubr.f32.mxu0 0.0
        %497 = vmatmul.mubr.f32.gmra.mxu0 %v426
        %v498 = vpop.f32.mrf.mxu0
        %v499 = vadd.f32 %v430, %v498
        %v500 = vpop.f32.mrf.mxu0
        %501 = vdwg.mxu0
        %502 = vst [vmem:[%s264] sm:$0x1] %v499
        %s503 = sand.u32 %s114, 1
        %s504 = scalar_lea.sflag [#allocation6], %s503
        %s505 = sand.u32 %s114, 1
        %s506 = scalar_lea.vmem [#allocation10], %s505
        // Predicated region
        $region45: #{tpu_custom_call.1} parent=31 // pred_check
          %p507 = pneg %p124
        $region46: #{tpu_custom_call.1} parent=31 // pred_check_branch
          %509 = sbr.rel (%p507) target = $region48
        $region47: #{tpu_custom_call.1} parent=31 // pred_region
          %s511 = ssub.s32 16, 16
          %512 = vsyncadd %s504, %s511
          %s513 = smul.addr %s28, 16
          %s514 = scalar_lea.hbm %s4, %s513
          %s516 = sshll.u32 %s506, 4
          %s517 = int_to_ptr.vmem [resolvable:$true] %s516
          %519 = dma.vmem_to_hbm [thread:$0]  %s517, 16, %s514, %s504
        $region48: #{tpu_custom_call.1} parent=31 // pred_fallthru
          _
      $region32: #{tpu_custom_call.1} parent=5 // pred_fallthru
        _
      %p520 = scmp.le.s32.totalorder 2, %s23
      // Predicated region
      $region49: #{tpu_custom_call.1} parent=5 // pred_check
        %p521 = pneg %p520
      $region50: #{tpu_custom_call.1} parent=5 // pred_check_branch
        %523 = sbr.rel (%p521) target = $region52
      $region51: #{tpu_custom_call.1} parent=5 // pred_region
        %s524 = ssub.s32 %s23, 2
        // Predicated region
        $region53: #{tpu_custom_call.1} parent=51 // pred_check
          %p525 = pneg %p130
        $region54: #{tpu_custom_call.1} parent=51 // pred_check_branch
          %527 = sbr.rel (%p525) target = $region56
        $region55: #{tpu_custom_call.1} parent=51 // pred_region
          %s528 = sand.u32 %s115, 1
          %s529 = scalar_lea.sflag [#allocation6], %s528
          %s530 = sand.u32 %s115, 1
          %s531 = scalar_lea.vmem [#allocation10], %s530
          %532 = dma.done %s529, 16
        $region56: #{tpu_custom_call.1} parent=51 // pred_fallthru
          _
      $region52: #{tpu_custom_call.1} parent=5 // pred_fallthru
        _
    $region6: #{tpu_custom_call.1} parent=1 // loop_footer
      %s27 = sadd.s32 1, %s23
    $region7: #{tpu_custom_call.1} parent=1 // loop_footer_branch
      %22 = sbr.rel target = $region3
    $region8: #{tpu_custom_call.1} parent=1 // loop_exit
      _
    %533 = vsyncpa [#allocation5], 1
    %s534 = scalar_lea.sflag [#allocation5], 1
    %535 = vsyncpa %s534, 1
    %536 = vsyncpa [#allocation8], 1
    %s537 = scalar_lea.sflag [#allocation8], 1
    %538 = vsyncpa %s537, 1
    %539 = vsyncpa [#allocation6], 1
    %s540 = scalar_lea.sflag [#allocation6], 1
    %541 = vsyncpa %s540, 1

</llo_original>
